<compile_context>
chip_gen: v7x
topology: tpu7x:2x2x1
jax: 0.10.0
libtpu: 0.0.40
codegen_flags: <defaults>
</compile_context>

<pallas_src>
import numpy as np
import jax
import jax.numpy as jnp
from jax.experimental import pallas as pl
from jax.experimental.pallas import tpu as pltpu

_POOL_SIZES = (1, 2, 3, 6)
_S_CAT = 64                      # 1 + 4 + 9 + 36 = 50 real pooled columns, padded to 64
_OP_CACHE = {}                   # (H, W, C_in, op_dtype) -> (AT_cat, UT_cat, mask)


def _pool_matrix_1d(in_size: int, out_size: int) -> np.ndarray:
    """Adaptive average pool as an (out_size, in_size) matrix (PyTorch windows)."""
    p = np.zeros((out_size, in_size), dtype=np.float32)
    for i in range(out_size):
        a = (i * in_size) // out_size
        b = -((-(i + 1) * in_size) // out_size)       # ceil((i+1)*in/out)
        p[i, a:b] = 1.0 / (b - a)
    return p


def _upsample_matrix_1d(in_size: int, out_size: int) -> np.ndarray:
    """Bilinear (align_corners=True) upsample as an (out_size, in_size) matrix."""
    u = np.zeros((out_size, in_size), dtype=np.float32)
    if in_size == 1:
        u[:, 0] = 1.0
        return u
    for o in range(out_size):
        src = o * (in_size - 1) / (out_size - 1)
        i0 = min(int(np.floor(src)), in_size - 1)
        i1 = min(i0 + 1, in_size - 1)
        f = src - i0
        u[o, i0] += 1.0 - f
        u[o, i1] += f
    return u


def _get_operators(H: int, W: int, C_in: int, Np: int, op_dtype):
    """Level-concatenated pool / upsample operators + level mask (cached)."""
    key = (H, W, C_in, Np, jnp.dtype(op_dtype).name)
    hit = _OP_CACHE.get(key)
    if hit is not None:
        return hit

    N = H * W
    inter = C_in // 4
    at = np.zeros((Np, _S_CAT), dtype=np.float32)     # x @ at  -> pooled (all levels)
    ut = np.zeros((_S_CAT, Np), dtype=np.float32)     # g @ ut  -> upsampled sum
    mask = np.zeros((4 * inter, _S_CAT), dtype=np.float32)
    off = 0
    for i, s in enumerate(_POOL_SIZES):
        a2 = np.kron(_pool_matrix_1d(H, s), _pool_matrix_1d(W, s))           # (s*s, N)
        u2 = np.kron(_upsample_matrix_1d(s, H), _upsample_matrix_1d(s, W))   # (N, s*s)
        at[:N, off:off + s * s] = a2.T
        ut[off:off + s * s, :N] = u2.T
        mask[i * inter:(i + 1) * inter, off:off + s * s] = 1.0
        off += s * s

    ops = (jnp.asarray(at, dtype=op_dtype),
           jnp.asarray(ut, dtype=op_dtype),
           jnp.asarray(mask, dtype=jnp.float32))
    _OP_CACHE[key] = ops
    return ops


def _ppm_kernel(x_ref, at_ref, ut_ref, wcat_ref, mask_ref, woutx_ref,
                wbig_ref, bias_ref, o_ref, g_ref):
    Bt, C_in, Np = x_ref.shape
    C_out = o_ref.shape[1]

    # --- big matmul #1: adaptive average pooling, all levels & batches ------
    x2 = x_ref[...].reshape(Bt * C_in, Np)                         # bf16
    pooled = jnp.dot(x2, at_ref[...],
                     preferred_element_type=jnp.float32)           # (Bt*C_in, S)
    pooled = pooled.astype(x2.dtype)

    # --- tiny per-batch channel mixing (static unrolled loop) ---------------
    for b in range(Bt):
        pb = pooled[b * C_in:(b + 1) * C_in, :]                    # (C_in, S)
        z = jnp.dot(wcat_ref[...], pb,
                    preferred_element_type=jnp.float32)            # (4*inter, S)
        z = (z * mask_ref[...]).astype(x2.dtype)                   # keep own-level cols
        g = jnp.dot(wbig_ref[...], z,
                    preferred_element_type=jnp.float32)            # (C_out, S)
        g_ref[b * C_out:(b + 1) * C_out, :] = g.astype(g_ref.dtype)

    # --- big matmul #2: bilinear upsample + pyramid slice of the out conv ---
    up = jnp.dot(g_ref[...], ut_ref[...],
                 preferred_element_type=jnp.float32)               # (Bt*C_out, Np)

    # --- `x` slice of the final 1x1 conv + folded bias ----------------------
    for b in range(Bt):
        acc = jnp.dot(woutx_ref[...], x_ref[b],
                      preferred_element_type=jnp.float32)          # (C_out, Np)
        acc = acc + up[b * C_out:(b + 1) * C_out, :] + bias_ref[...]
        o_ref[b] = acc.astype(o_ref.dtype)


def ppm_pallas(x_nchw: jax.Array, params: dict) -> jax.Array:
    B, C_in, H, W = x_nchw.shape
    assert C_in % 4 == 0 and C_in >= 4, "PPM requires in_channel divisible by 4"
    inter = C_in // 4
    C_out = params["out_w"].shape[0]
    N = H * W
    Np = ((N + 127) // 128) * 128            # lane-dense spatial axis
    S = _S_CAT
    dt = x_nchw.dtype
    op_dt = jnp.bfloat16                     # MXU-friendly operand dtype (f32 accumulate)

    at, ut, mask = _get_operators(H, W, C_in, Np, op_dt)

    # Batch block: fill MXU rows, but keep >=2 grid steps so both v7x TCs get work.
    Bt = max(1, min(B, 256 // C_in))
    if B >= 2 and B // Bt < 2:
        Bt = max(1, B // 2)
    Bp = ((B + Bt - 1) // Bt) * Bt

    x = x_nchw.reshape(B, C_in, N).astype(op_dt)
    if Bp != B or Np != N:
        x = jnp.pad(x, ((0, Bp - B), (0, 0), (0, Np - N)))

    # Weights, pre-split / pre-concatenated so the kernel does plain (M,K)x(K,N) dots.
    out_w = params["out_w"].astype(jnp.float32)                    # (C_out, 2*C_in)
    wcat = jnp.concatenate([w.astype(jnp.float32) for w in params["conv_w"]],
                           axis=0).astype(op_dt)                   # (4*inter, C_in)
    woutx = out_w[:, :C_in].astype(op_dt)                          # (C_out, C_in)
    wbig = out_w[:, C_in:].astype(op_dt)                           # (C_out, 4*inter)
    # Fold every bias into one (C_out, 1) f32 vector (bilinear rows sum to 1;
    # padded spatial columns are discarded after the call).
    cb = jnp.concatenate([b.astype(jnp.float32) for b in params["conv_b"]])   # (4*inter,)
    bias = (params["out_b"].astype(jnp.float32) + out_w[:, C_in:] @ cb)[:, None]

    def _nbytes(shape, dtype):
        return int(np.prod(shape)) * jnp.dtype(dtype).itemsize

    # Generous VMEM budget (2x-buffered blocks + intermediates margin), capped at 64 MiB.
    vmem_est = (2 * (_nbytes((Bt, C_in, Np), op_dt) + _nbytes((Bt, C_out, Np), dt))
                + 2 * (_nbytes((Np, S), op_dt) + _nbytes((S, Np), op_dt))
                + 2 * (_nbytes((4 * inter, C_in), op_dt)
                       + _nbytes((4 * inter, S), jnp.float32)
                       + _nbytes((C_out, C_in), op_dt)
                       + _nbytes((C_out, 4 * inter), op_dt)
                       + _nbytes((C_out, 128), jnp.float32))
                + _nbytes((Bt * C_out, S), op_dt)
                + _nbytes((Bt * (C_in + 2 * C_out), Np), jnp.float32))
    vmem_limit = int(min(max(4 * vmem_est, 32 << 20), 64 << 20))

    flops = 2 * Bp * (C_in * Np * S                 # pooling
                      + 4 * inter * C_in * S        # per-level 1x1 convs
                      + C_out * 4 * inter * S       # pyramid slice of out conv
                      + C_out * S * Np              # upsample
                      + C_out * C_in * Np)          # x slice of out conv
    bytes_accessed = (_nbytes((Bp, C_in, Np), op_dt) + _nbytes((Bp, C_out, Np), dt)
                      + _nbytes((Np, S), op_dt) + _nbytes((S, Np), op_dt)
                      + _nbytes((4 * inter, C_in + S), jnp.float32)
                      + _nbytes((C_out, 2 * C_in + 1), jnp.float32))

    out = pl.pallas_call(
        _ppm_kernel,
        out_shape=jax.ShapeDtypeStruct((Bp, C_out, Np), dt),
        grid=(Bp // Bt,),
        in_specs=[
            pl.BlockSpec((Bt, C_in, Np), lambda b: (b, 0, 0)),      # x (batch block)
            pl.BlockSpec((Np, S), lambda b: (0, 0)),                # AT_cat (invariant)
            pl.BlockSpec((S, Np), lambda b: (0, 0)),                # UT_cat (invariant)
            pl.BlockSpec((4 * inter, C_in), lambda b: (0, 0)),      # Wc_cat
            pl.BlockSpec((4 * inter, S), lambda b: (0, 0)),         # level mask
            pl.BlockSpec((C_out, C_in), lambda b: (0, 0)),          # Wout[:, :C_in]
            pl.BlockSpec((C_out, 4 * inter), lambda b: (0, 0)),     # Wout[:, C_in:]
            pl.BlockSpec((C_out, 1), lambda b: (0, 0)),             # folded bias
        ],
        out_specs=pl.BlockSpec((Bt, C_out, Np), lambda b: (b, 0, 0)),
        scratch_shapes=[pltpu.VMEM((Bt * C_out, S), op_dt)],        # stacked G
        compiler_params=pltpu.CompilerParams(
            dimension_semantics=("parallel",),
            vmem_limit_bytes=vmem_limit,
        ),
        cost_estimate=pl.CostEstimate(flops=flops, transcendentals=0,
                                      bytes_accessed=bytes_accessed),
    )(x, at, ut, wcat, mask, woutx, wbig, bias)

    return out[:B, :, :N].reshape(B, C_out, H, W)


# ----------------------------- pure-JAX reference -----------------------------

def _adaptive_avg_pool_ref(x, s):
    B, C, H, W = x.shape
    rows = []
    for i in range(s):
        h0, h1 = (i * H) // s, -((-(i + 1) * H) // s)
        cols = []
        for j in range(s):
            w0, w1 = (j * W) // s, -((-(j + 1) * W) // s)
            cols.append(jnp.mean(x[:, :, h0:h1, w0:w1], axis=(2, 3)))
        rows.append(jnp.stack(cols, axis=-1))
    return jnp.stack(rows, axis=-2)                  # (B, C, s, s)


def _upsample_bilinear_ref(x, H, W):
    B, C, s, _ = x.shape
    if s == 1:
        return jnp.broadcast_to(x, (B, C, H, W))
    src_h = jnp.arange(H, dtype=jnp.float32) * (s - 1) / (H - 1)
    src_w = jnp.arange(W, dtype=jnp.float32) * (s - 1) / (W - 1)
    h0 = jnp.floor(src_h).astype(jnp.int32)
    w0 = jnp.floor(src_w).astype(jnp.int32)
    h1 = jnp.minimum(h0 + 1, s - 1)
    w1 = jnp.minimum(w0 + 1, s - 1)
    fh = (src_h - h0)[:, None]
    fw = (src_w - w0)[None, :]
    g = lambda hi, wi: x[:, :, hi, :][:, :, :, wi]   # (B, C, H, W)
    top = g(h0, w0) * (1.0 - fw) + g(h0, w1) * fw
    bot = g(h1, w0) * (1.0 - fw) + g(h1, w1) * fw
    return top * (1.0 - fh) + bot * fh


def ppm_reference(x_nchw, params):
    x = x_nchw.astype(jnp.float32)
    B, C, H, W = x.shape
    hp = jax.lax.Precision.HIGHEST
    feats = [x]
    for i, s in enumerate(_POOL_SIZES):
        p = _adaptive_avg_pool_ref(x, s)
        w = params["conv_w"][i].astype(jnp.float32)
        b = params["conv_b"][i].astype(jnp.float32)
        y = jnp.einsum("oc,bcij->boij", w, p, precision=hp) + b[None, :, None, None]
        feats.append(_upsample_bilinear_ref(y, H, W))
    cat = jnp.concatenate(feats, axis=1)
    out = jnp.einsum("oc,bchw->bohw", params["out_w"].astype(jnp.float32), cat,
                     precision=hp)
    out = out + params["out_b"].astype(jnp.float32)[None, :, None, None]
    return out.astype(x_nchw.dtype)


def init_ppm_params(key, in_channel, out_channel):
    """Deterministic PyTorch-like init (uniform +-1/sqrt(fan_in))."""
    inter = in_channel // 4
    keys = jax.random.split(key, 10)

    def conv_init(kw, kb, fan_in, out_c):
        bound = 1.0 / float(np.sqrt(fan_in))
        w = jax.random.uniform(kw, (out_c, fan_in), jnp.float32, -bound, bound)
        b = jax.random.uniform(kb, (out_c,), jnp.float32, -bound, bound)
        return w, b

    conv_w, conv_b = [], []
    for i in range(4):
        w, b = conv_init(keys[2 * i], keys[2 * i + 1], in_channel, inter)
        conv_w.append(w)
        conv_b.append(b)
    out_w, out_b = conv_init(keys[8], keys[9], 2 * in_channel, out_channel)
    return {"conv_w": conv_w, "conv_b": conv_b, "out_w": out_w, "out_b": out_b}


if __name__ == "__main__":
    key = jax.random.PRNGKey(0)
    kx, kp = jax.random.split(key)

    B, C_in, H, W = 4, 16, 16, 16      # interchannel = 4
    C_out = 8

    x = jax.random.normal(kx, (B, C_in, H, W), dtype=jnp.float32)
    params = init_ppm_params(kp, C_in, C_out)

    y = ppm_pallas(x, params)
    jax.block_until_ready(y)

    y_ref = ppm_reference(x, params)
    assert y.shape == (B, C_out, H, W)
    err = float(jnp.max(jnp.abs(y.astype(jnp.float32) - y_ref.astype(jnp.float32))))
    # bf16 MXU operands (f32 accumulation) -> relaxed absolute tolerance vs f32 reference.
    assert err < 3e-2, err

    print("KERNEL_OK")
</pallas_src>

<mosaic_0001>
module attributes {stable_mosaic.version = 11 : i64} {
  func.func @_ppm_kernel(%arg0: i32, %arg1: memref<2x16x256xbf16, #tpu.memory_space<vmem>>, %arg2: memref<256x64xbf16, #tpu.memory_space<vmem>>, %arg3: memref<64x256xbf16, #tpu.memory_space<vmem>>, %arg4: memref<16x16xbf16, #tpu.memory_space<vmem>>, %arg5: memref<16x64xf32, #tpu.memory_space<vmem>>, %arg6: memref<8x16xbf16, #tpu.memory_space<vmem>>, %arg7: memref<8x16xbf16, #tpu.memory_space<vmem>>, %arg8: memref<8x1xf32, #tpu.memory_space<vmem>>, %arg9: memref<2x8x256xf32, #tpu.memory_space<vmem>>, %arg10: memref<16x64xbf16, #tpu.memory_space<vmem>>) attributes {dimension_semantics = [#tpu.dimension_semantics<parallel>], iteration_bounds = array<i64: 2>, scalar_prefetch = 0 : i64, scratch_operands = 1 : i64, tpu.core_type = #tpu.core_type<tc>, window_params = [{transform_indices = @transform_0, window_bounds = array<i64: 2, 16, 256>}, {pipeline_mode = #tpu.pipeline_mode<synchronous>, transform_indices = @transform_1, window_bounds = array<i64: 256, 64>}, {pipeline_mode = #tpu.pipeline_mode<synchronous>, transform_indices = @transform_2, window_bounds = array<i64: 64, 256>}, {pipeline_mode = #tpu.pipeline_mode<synchronous>, transform_indices = @transform_3, window_bounds = array<i64: 16, 16>}, {pipeline_mode = #tpu.pipeline_mode<synchronous>, transform_indices = @transform_4, window_bounds = array<i64: 16, 64>}, {pipeline_mode = #tpu.pipeline_mode<synchronous>, transform_indices = @transform_5, window_bounds = array<i64: 8, 16>}, {pipeline_mode = #tpu.pipeline_mode<synchronous>, transform_indices = @transform_6, window_bounds = array<i64: 8, 16>}, {pipeline_mode = #tpu.pipeline_mode<synchronous>, transform_indices = @transform_7, window_bounds = array<i64: 8, 1>}, {transform_indices = @transform_8, window_bounds = array<i64: 2, 8, 256>}]} {
    %c0 = arith.constant 0 : index
    %c0_0 = arith.constant 0 : index
    %c0_1 = arith.constant 0 : index
    %0 = vector.load %arg1[%c0, %c0_0, %c0_1] : memref<2x16x256xbf16, #tpu.memory_space<vmem>>, vector<2x16x256xbf16>
    %1 = vector.shape_cast %0 : vector<2x16x256xbf16> to vector<32x256xbf16>
    %c0_2 = arith.constant 0 : index
    %c0_3 = arith.constant 0 : index
    %2 = vector.load %arg2[%c0_2, %c0_3] : memref<256x64xbf16, #tpu.memory_space<vmem>>, vector<256x64xbf16>
    %cst = arith.constant dense<0.000000e+00> : vector<32x64xf32>
    %3 = tpu.matmul %1, %2, %cst {dimension_numbers = #tpu.dot_dimension_numbers<[1], [0], [0], [1], [0, 0, 1, 1], [], []>} : vector<32x256xbf16>, vector<256x64xbf16>, vector<32x64xf32> -> vector<32x64xf32>
    %4 = arith.truncf %3 : vector<32x64xf32> to vector<32x64xbf16>
    %5 = vector.extract_strided_slice %4 {offsets = [0, 0], sizes = [16, 64], strides = [1, 1]} : vector<32x64xbf16> to vector<16x64xbf16>
    %c0_4 = arith.constant 0 : index
    %c0_5 = arith.constant 0 : index
    %6 = vector.load %arg4[%c0_4, %c0_5] : memref<16x16xbf16, #tpu.memory_space<vmem>>, vector<16x16xbf16>
    %cst_6 = arith.constant dense<0.000000e+00> : vector<16x64xf32>
    %7 = tpu.matmul %6, %5, %cst_6 {dimension_numbers = #tpu.dot_dimension_numbers<[1], [0], [0], [1], [0, 0, 1, 1], [], []>} : vector<16x16xbf16>, vector<16x64xbf16>, vector<16x64xf32> -> vector<16x64xf32>
    %c0_7 = arith.constant 0 : index
    %c0_8 = arith.constant 0 : index
    %8 = vector.load %arg5[%c0_7, %c0_8] : memref<16x64xf32, #tpu.memory_space<vmem>>, vector<16x64xf32>
    %9 = arith.mulf %7, %8 : vector<16x64xf32>
    %10 = arith.truncf %9 : vector<16x64xf32> to vector<16x64xbf16>
    %c0_9 = arith.constant 0 : index
    %c0_10 = arith.constant 0 : index
    %11 = vector.load %arg7[%c0_9, %c0_10] : memref<8x16xbf16, #tpu.memory_space<vmem>>, vector<8x16xbf16>
    %cst_11 = arith.constant dense<0.000000e+00> : vector<8x64xf32>
    %12 = tpu.matmul %11, %10, %cst_11 {dimension_numbers = #tpu.dot_dimension_numbers<[1], [0], [0], [1], [0, 0, 1, 1], [], []>} : vector<8x16xbf16>, vector<16x64xbf16>, vector<8x64xf32> -> vector<8x64xf32>
    %13 = arith.truncf %12 : vector<8x64xf32> to vector<8x64xbf16>
    %c0_12 = arith.constant 0 : index
    %c0_13 = arith.constant 0 : index
    %14 = vector.load %arg10[%c0_12, %c0_13] : memref<16x64xbf16, #tpu.memory_space<vmem>>, vector<8x64xbf16>
    tpu.vector_store %arg10[%c0_12, %c0_13], %13 {strides = array<i32>} : memref<16x64xbf16, #tpu.memory_space<vmem>>, vector<8x64xbf16>,
    %15 = vector.extract_strided_slice %4 {offsets = [16, 0], sizes = [16, 64], strides = [1, 1]} : vector<32x64xbf16> to vector<16x64xbf16>
    %c0_14 = arith.constant 0 : index
    %c0_15 = arith.constant 0 : index
    %16 = vector.load %arg4[%c0_14, %c0_15] : memref<16x16xbf16, #tpu.memory_space<vmem>>, vector<16x16xbf16>
    %cst_16 = arith.constant dense<0.000000e+00> : vector<16x64xf32>
    %17 = tpu.matmul %16, %15, %cst_16 {dimension_numbers = #tpu.dot_dimension_numbers<[1], [0], [0], [1], [0, 0, 1, 1], [], []>} : vector<16x16xbf16>, vector<16x64xbf16>, vector<16x64xf32> -> vector<16x64xf32>
    %c0_17 = arith.constant 0 : index
    %c0_18 = arith.constant 0 : index
    %18 = vector.load %arg5[%c0_17, %c0_18] : memref<16x64xf32, #tpu.memory_space<vmem>>, vector<16x64xf32>
    %19 = arith.mulf %17, %18 : vector<16x64xf32>
    %20 = arith.truncf %19 : vector<16x64xf32> to vector<16x64xbf16>
    %c0_19 = arith.constant 0 : index
    %c0_20 = arith.constant 0 : index
    %21 = vector.load %arg7[%c0_19, %c0_20] : memref<8x16xbf16, #tpu.memory_space<vmem>>, vector<8x16xbf16>
    %cst_21 = arith.constant dense<0.000000e+00> : vector<8x64xf32>
    %22 = tpu.matmul %21, %20, %cst_21 {dimension_numbers = #tpu.dot_dimension_numbers<[1], [0], [0], [1], [0, 0, 1, 1], [], []>} : vector<8x16xbf16>, vector<16x64xbf16>, vector<8x64xf32> -> vector<8x64xf32>
    %23 = arith.truncf %22 : vector<8x64xf32> to vector<8x64xbf16>
    %c8 = arith.constant 8 : index
    %c0_22 = arith.constant 0 : index
    %24 = vector.load %arg10[%c8, %c0_22] : memref<16x64xbf16, #tpu.memory_space<vmem>>, vector<8x64xbf16>
    tpu.vector_store %arg10[%c8, %c0_22], %23 {strides = array<i32>} : memref<16x64xbf16, #tpu.memory_space<vmem>>, vector<8x64xbf16>,
    %c0_23 = arith.constant 0 : index
    %c0_24 = arith.constant 0 : index
    %25 = vector.load %arg10[%c0_23, %c0_24] : memref<16x64xbf16, #tpu.memory_space<vmem>>, vector<16x64xbf16>
    %c0_25 = arith.constant 0 : index
    %c0_26 = arith.constant 0 : index
    %26 = vector.load %arg3[%c0_25, %c0_26] : memref<64x256xbf16, #tpu.memory_space<vmem>>, vector<64x256xbf16>
    %cst_27 = arith.constant dense<0.000000e+00> : vector<16x256xf32>
    %27 = tpu.matmul %25, %26, %cst_27 {dimension_numbers = #tpu.dot_dimension_numbers<[1], [0], [0], [1], [0, 0, 1, 1], [], []>} : vector<16x64xbf16>, vector<64x256xbf16>, vector<16x256xf32> -> vector<16x256xf32>
    %c0_28 = arith.constant 0 : index
    %c0_29 = arith.constant 0 : index
    %28 = vector.load %arg6[%c0_28, %c0_29] : memref<8x16xbf16, #tpu.memory_space<vmem>>, vector<8x16xbf16>
    %c0_30 = arith.constant 0 : index
    %c0_31 = arith.constant 0 : index
    %c0_32 = arith.constant 0 : index
    %29 = vector.load %arg1[%c0_30, %c0_31, %c0_32] : memref<2x16x256xbf16, #tpu.memory_space<vmem>>, vector<1x16x256xbf16>
    %30 = vector.shape_cast %29 : vector<1x16x256xbf16> to vector<16x256xbf16>
    %cst_33 = arith.constant dense<0.000000e+00> : vector<8x256xf32>
    %31 = tpu.matmul %28, %30, %cst_33 {dimension_numbers = #tpu.dot_dimension_numbers<[1], [0], [0], [1], [0, 0, 1, 1], [], []>} : vector<8x16xbf16>, vector<16x256xbf16>, vector<8x256xf32> -> vector<8x256xf32>
    %32 = vector.extract_strided_slice %27 {offsets = [0, 0], sizes = [8, 256], strides = [1, 1]} : vector<16x256xf32> to vector<8x256xf32>
    %33 = arith.addf %31, %32 : vector<8x256xf32>
    %c0_34 = arith.constant 0 : index
    %c0_35 = arith.constant 0 : index
    %34 = vector.load %arg8[%c0_34, %c0_35] : memref<8x1xf32, #tpu.memory_space<vmem>>, vector<8x1xf32>
    %35 = vector.broadcast %34 : vector<8x1xf32> to vector<8x256xf32>
    %36 = arith.addf %33, %35 : vector<8x256xf32>
    %c0_36 = arith.constant 0 : index
    %c0_37 = arith.constant 0 : index
    %c0_38 = arith.constant 0 : index
    %37 = vector.load %arg9[%c0_36, %c0_37, %c0_38] : memref<2x8x256xf32, #tpu.memory_space<vmem>>, vector<1x8x256xf32>
    %38 = vector.shape_cast %37 : vector<1x8x256xf32> to vector<8x256xf32>
    %39 = vector.shape_cast %36 : vector<8x256xf32> to vector<1x8x256xf32>
    tpu.vector_store %arg9[%c0_36, %c0_37, %c0_38], %39 {strides = array<i32>} : memref<2x8x256xf32, #tpu.memory_space<vmem>>, vector<1x8x256xf32>,
    %c0_39 = arith.constant 0 : index
    %c0_40 = arith.constant 0 : index
    %40 = vector.load %arg6[%c0_39, %c0_40] : memref<8x16xbf16, #tpu.memory_space<vmem>>, vector<8x16xbf16>
    %c1 = arith.constant 1 : index
    %c0_41 = arith.constant 0 : index
    %c0_42 = arith.constant 0 : index
    %41 = vector.load %arg1[%c1, %c0_41, %c0_42] : memref<2x16x256xbf16, #tpu.memory_space<vmem>>, vector<1x16x256xbf16>
    %42 = vector.shape_cast %41 : vector<1x16x256xbf16> to vector<16x256xbf16>
    %cst_43 = arith.constant dense<0.000000e+00> : vector<8x256xf32>
    %43 = tpu.matmul %40, %42, %cst_43 {dimension_numbers = #tpu.dot_dimension_numbers<[1], [0], [0], [1], [0, 0, 1, 1], [], []>} : vector<8x16xbf16>, vector<16x256xbf16>, vector<8x256xf32> -> vector<8x256xf32>
    %44 = vector.extract_strided_slice %27 {offsets = [8, 0], sizes = [8, 256], strides = [1, 1]} : vector<16x256xf32> to vector<8x256xf32>
    %45 = arith.addf %43, %44 : vector<8x256xf32>
    %c0_44 = arith.constant 0 : index
    %c0_45 = arith.constant 0 : index
    %46 = vector.load %arg8[%c0_44, %c0_45] : memref<8x1xf32, #tpu.memory_space<vmem>>, vector<8x1xf32>
    %47 = vector.broadcast %46 : vector<8x1xf32> to vector<8x256xf32>
    %48 = arith.addf %45, %47 : vector<8x256xf32>
    %c1_46 = arith.constant 1 : index
    %c0_47 = arith.constant 0 : index
    %c0_48 = arith.constant 0 : index
    %49 = vector.load %arg9[%c1_46, %c0_47, %c0_48] : memref<2x8x256xf32, #tpu.memory_space<vmem>>, vector<1x8x256xf32>
    %50 = vector.shape_cast %49 : vector<1x8x256xf32> to vector<8x256xf32>
    %51 = vector.shape_cast %48 : vector<8x256xf32> to vector<1x8x256xf32>
    tpu.vector_store %arg9[%c1_46, %c0_47, %c0_48], %51 {strides = array<i32>} : memref<2x8x256xf32, #tpu.memory_space<vmem>>, vector<1x8x256xf32>,
    return
  }
  func.func @transform_0(%arg0: i32) -> (i32, i32, i32) {
    %c0_i32 = arith.constant 0 : i32
    %c0_i32_0 = arith.constant 0 : i32
    %c0_i32_1 = arith.constant 0 : i32
    return %arg0, %c0_i32, %c0_i32_0 : i32, i32, i32
  }
  func.func @transform_1(%arg0: i32) -> (i32, i32) {
    %c0_i32 = arith.constant 0 : i32
    %c0_i32_0 = arith.constant 0 : i32
    %c0_i32_1 = arith.constant 0 : i32
    return %c0_i32, %c0_i32_0 : i32, i32
  }
  func.func @transform_2(%arg0: i32) -> (i32, i32) {
    %c0_i32 = arith.constant 0 : i32
    %c0_i32_0 = arith.constant 0 : i32
    %c0_i32_1 = arith.constant 0 : i32
    return %c0_i32, %c0_i32_0 : i32, i32
  }
  func.func @transform_3(%arg0: i32) -> (i32, i32) {
    %c0_i32 = arith.constant 0 : i32
    %c0_i32_0 = arith.constant 0 : i32
    %c0_i32_1 = arith.constant 0 : i32
    return %c0_i32, %c0_i32_0 : i32, i32
  }
  func.func @transform_4(%arg0: i32) -> (i32, i32) {
    %c0_i32 = arith.constant 0 : i32
    %c0_i32_0 = arith.constant 0 : i32
    %c0_i32_1 = arith.constant 0 : i32
    return %c0_i32, %c0_i32_0 : i32, i32
  }
  func.func @transform_5(%arg0: i32) -> (i32, i32) {
    %c0_i32 = arith.constant 0 : i32
    %c0_i32_0 = arith.constant 0 : i32
    %c0_i32_1 = arith.constant 0 : i32
    return %c0_i32, %c0_i32_0 : i32, i32
  }
  func.func @transform_6(%arg0: i32) -> (i32, i32) {
    %c0_i32 = arith.constant 0 : i32
    %c0_i32_0 = arith.constant 0 : i32
    %c0_i32_1 = arith.constant 0 : i32
    return %c0_i32, %c0_i32_0 : i32, i32
  }
  func.func @transform_7(%arg0: i32) -> (i32, i32) {
    %c0_i32 = arith.constant 0 : i32
    %c0_i32_0 = arith.constant 0 : i32
    %c0_i32_1 = arith.constant 0 : i32
    return %c0_i32, %c0_i32_0 : i32, i32
  }
  func.func @transform_8(%arg0: i32) -> (i32, i32, i32) {
    %c0_i32 = arith.constant 0 : i32
    %c0_i32_0 = arith.constant 0 : i32
    %c0_i32_1 = arith.constant 0 : i32
    return %arg0, %c0_i32, %c0_i32_0 : i32, i32, i32
  }
}

</mosaic_0001>

<llo_original>
// kernel: tpu_custom_call.1
$region0: #{tpu_custom_call.1}
  #allocation0 [shape = 'u32[]', space=smem, size = 0x4, offset = 0x4, fixed_abs, tag = 'smem constant byte address 0x4 - core index']
  #allocation1 [shape = 'u32[144,128]{1,0:T(1,128)}', space=vmem, size = 0x12000, scoped, tag = 'internal scratch']
  #allocation2 [shape = 'bf16[16,64]{1,0:T(16,128)(2,1)}', space=vmem, size = 0x1000, scoped, tag = 'scratch operand']
  %s0 = inlined_call_operand.vmem [shape: bf16[4,16,256], index: 0, kind: input, shape index: {}]
  %s1 = inlined_call_operand.vmem [shape: bf16[256,64], index: 1, kind: input, shape index: {}]
  %s2 = inlined_call_operand.vmem [shape: bf16[64,256], index: 2, kind: input, shape index: {}]
  %s3 = inlined_call_operand.vmem [shape: bf16[16,16], index: 3, kind: input, shape index: {}]
  %s4 = inlined_call_operand.vmem [shape: f32[16,64], index: 4, kind: input, shape index: {}]
  %s5 = inlined_call_operand.vmem [shape: bf16[8,16], index: 5, kind: input, shape index: {}]
  %s6 = inlined_call_operand.vmem [shape: bf16[8,16], index: 6, kind: input, shape index: {}]
  %s7 = inlined_call_operand.vmem [shape: f32[8,1], index: 7, kind: input, shape index: {}]
  %s8 = inlined_call_operand.hbm [shape: f32[4,8,256], index: 8, kind: output, shape index: {}]
  %s9 = sld [smem:[#allocation0]]
  $region65: #{tpu_custom_call.1} parent=0
    _
  %s11 = ssub.s32 1, %s9
  %s12 = scalar_select 0, %s11, %s9
  $region1: #{tpu_custom_call.1} parent=0
    #allocation3 [shape = 'u8[32768]{0}', space=vmem, size = 0x8000, scoped, tag = 'output window, operand 0']
    #allocation4 [shape = 's32[2]{0}', space=sflag, size = 0x8, scoped, tag = 'scoped memory for tpu_custom_call.1']
    %13 = vsyncpa [#allocation4], 0
    %s14 = scalar_lea.sflag [#allocation4], 1
    %15 = vsyncpa %s14, 0
    loop: start=0, step=1, limit=4
    $region2: #{tpu_custom_call.1} parent=1 // loop_pre_header
      _
    $region3: #{tpu_custom_call.1} parent=1 // loop_header
      %s17 = sphi 0, %s21
      %p18 = scmp.ge.s32.totalorder %s17, 4
      %s27 = sphi 0, %s29
      %s30 = sphi 0, %s27
      %s31 = sphi 0, %s30
      %s47 = sphi 0, %s31
      %s51 = sphi 0, %s51
      %s53 = sphi 0, %s51
      %s54 = sphi 0, %s53
      %s68 = sphi 0, %s54
      %s72 = sphi 0, %s72
      %s74 = sphi 0, %s72
      %s75 = sphi 0, %s74
      %s89 = sphi 0, %s75
      %s93 = sphi 0, %s93
      %s95 = sphi 0, %s93
      %s96 = sphi 0, %s95
      %s110 = sphi 0, %s96
      %s114 = sphi 0, %s114
      %s116 = sphi 0, %s114
      %s117 = sphi 0, %s116
      %s131 = sphi 0, %s117
      %s135 = sphi 0, %s135
      %s137 = sphi 0, %s135
      %s138 = sphi 0, %s137
      %s152 = sphi 0, %s138
      %s156 = sphi 0, %s156
      %s158 = sphi 0, %s156
      %s159 = sphi 0, %s158
      %s173 = sphi 0, %s159
      %s177 = sphi 0, %s177
      %s179 = sphi 0, %s177
      %s180 = sphi 0, %s179
      %s194 = sphi 0, %s180
      %s200 = sphi 0, %s202
      %s203 = sphi 0, %s200
      %s204 = sphi 0, %s203
      %s220 = sphi 0, %s204
    $region4: #{tpu_custom_call.1} parent=1 // loop_header_branch
      %20 = sbr.rel (%p18) target = $region8
    $region5: #{tpu_custom_call.1} parent=1 // loop_body
      %s22 = ssub.s32 %s17, 1
      %s23 = ssub.s32 %s17, 2
      %s24 = sadd.s32 %s17, 1
      %s25 = ssub.s32 %s17, %s24
      %p26 = scmp.eq.s32.totalorder %s25, 0
      %s28 = sadd.s32 %s27, 1
      %s29 = scalar_select %p26, %s27, %s28
      %p32 = pneg %p26
      %p33 = scmp.eq.s32.totalorder %s17, 1
      %p34 = por %p32, %p33
      %p35 = scmp.ne.s32.totalorder %s27, %s30
      %p36 = scmp.eq.s32.totalorder %s17, 0
      %p37 = por %p35, %p36
      %p38 = scmp.ne.s32.totalorder %s27, %s30
      %p39 = scmp.eq.s32.totalorder %s22, 1
      %p40 = por %p38, %p39
      %p41 = scmp.ne.s32.totalorder %s30, %s31
      %p42 = scmp.eq.s32.totalorder %s22, 0
      %p43 = por %p41, %p42
      %p44 = scmp.ne.s32.totalorder %s30, %s31
      %p45 = scmp.eq.s32.totalorder %s23, 1
      %p46 = por %p44, %p45
      %p48 = scmp.ne.s32.totalorder %s31, %s47
      %p49 = scmp.eq.s32.totalorder %s23, 0
      %p50 = por %p48, %p49
      %s52 = sadd.s32 %s51, 1
      %p55 = scmp.eq.s32.totalorder %s17, 1
      %p56 = scmp.ne.s32.totalorder %s51, %s53
      %p57 = scmp.eq.s32.totalorder %s17, 0
      %p58 = por %p56, %p57
      %p59 = scmp.ne.s32.totalorder %s51, %s53
      %p60 = scmp.eq.s32.totalorder %s22, 1
      %p61 = por %p59, %p60
      %p62 = scmp.ne.s32.totalorder %s53, %s54
      %p63 = scmp.eq.s32.totalorder %s22, 0
      %p64 = por %p62, %p63
      %p65 = scmp.ne.s32.totalorder %s53, %s54
      %p66 = scmp.eq.s32.totalorder %s23, 1
      %p67 = por %p65, %p66
      %p69 = scmp.ne.s32.totalorder %s54, %s68
      %p70 = scmp.eq.s32.totalorder %s23, 0
      %p71 = por %p69, %p70
      %s73 = sadd.s32 %s72, 1
      %p76 = scmp.eq.s32.totalorder %s17, 1
      %p77 = scmp.ne.s32.totalorder %s72, %s74
      %p78 = scmp.eq.s32.totalorder %s17, 0
      %p79 = por %p77, %p78
      %p80 = scmp.ne.s32.totalorder %s72, %s74
      %p81 = scmp.eq.s32.totalorder %s22, 1
      %p82 = por %p80, %p81
      %p83 = scmp.ne.s32.totalorder %s74, %s75
      %p84 = scmp.eq.s32.totalorder %s22, 0
      %p85 = por %p83, %p84
      %p86 = scmp.ne.s32.totalorder %s74, %s75
      %p87 = scmp.eq.s32.totalorder %s23, 1
      %p88 = por %p86, %p87
      %p90 = scmp.ne.s32.totalorder %s75, %s89
      %p91 = scmp.eq.s32.totalorder %s23, 0
      %p92 = por %p90, %p91
      %s94 = sadd.s32 %s93, 1
      %p97 = scmp.eq.s32.totalorder %s17, 1
      %p98 = scmp.ne.s32.totalorder %s93, %s95
      %p99 = scmp.eq.s32.totalorder %s17, 0
      %p100 = por %p98, %p99
      %p101 = scmp.ne.s32.totalorder %s93, %s95
      %p102 = scmp.eq.s32.totalorder %s22, 1
      %p103 = por %p101, %p102
      %p104 = scmp.ne.s32.totalorder %s95, %s96
      %p105 = scmp.eq.s32.totalorder %s22, 0
      %p106 = por %p104, %p105
      %p107 = scmp.ne.s32.totalorder %s95, %s96
      %p108 = scmp.eq.s32.totalorder %s23, 1
      %p109 = por %p107, %p108
      %p111 = scmp.ne.s32.totalorder %s96, %s110
      %p112 = scmp.eq.s32.totalorder %s23, 0
      %p113 = por %p111, %p112
      %s115 = sadd.s32 %s114, 1
      %p118 = scmp.eq.s32.totalorder %s17, 1
      %p119 = scmp.ne.s32.totalorder %s114, %s116
      %p120 = scmp.eq.s32.totalorder %s17, 0
      %p121 = por %p119, %p120
      %p122 = scmp.ne.s32.totalorder %s114, %s116
      %p123 = scmp.eq.s32.totalorder %s22, 1
      %p124 = por %p122, %p123
      %p125 = scmp.ne.s32.totalorder %s116, %s117
      %p126 = scmp.eq.s32.totalorder %s22, 0
      %p127 = por %p125, %p126
      %p128 = scmp.ne.s32.totalorder %s116, %s117
      %p129 = scmp.eq.s32.totalorder %s23, 1
      %p130 = por %p128, %p129
      %p132 = scmp.ne.s32.totalorder %s117, %s131
      %p133 = scmp.eq.s32.totalorder %s23, 0
      %p134 = por %p132, %p133
      %s136 = sadd.s32 %s135, 1
      %p139 = scmp.eq.s32.totalorder %s17, 1
      %p140 = scmp.ne.s32.totalorder %s135, %s137
      %p141 = scmp.eq.s32.totalorder %s17, 0
      %p142 = por %p140, %p141
      %p143 = scmp.ne.s32.totalorder %s135, %s137
      %p144 = scmp.eq.s32.totalorder %s22, 1
      %p145 = por %p143, %p144
      %p146 = scmp.ne.s32.totalorder %s137, %s138
      %p147 = scmp.eq.s32.totalorder %s22, 0
      %p148 = por %p146, %p147
      %p149 = scmp.ne.s32.totalorder %s137, %s138
      %p150 = scmp.eq.s32.totalorder %s23, 1
      %p151 = por %p149, %p150
      %p153 = scmp.ne.s32.totalorder %s138, %s152
      %p154 = scmp.eq.s32.totalorder %s23, 0
      %p155 = por %p153, %p154
      %s157 = sadd.s32 %s156, 1
      %p160 = scmp.eq.s32.totalorder %s17, 1
      %p161 = scmp.ne.s32.totalorder %s156, %s158
      %p162 = scmp.eq.s32.totalorder %s17, 0
      %p163 = por %p161, %p162
      %p164 = scmp.ne.s32.totalorder %s156, %s158
      %p165 = scmp.eq.s32.totalorder %s22, 1
      %p166 = por %p164, %p165
      %p167 = scmp.ne.s32.totalorder %s158, %s159
      %p168 = scmp.eq.s32.totalorder %s22, 0
      %p169 = por %p167, %p168
      %p170 = scmp.ne.s32.totalorder %s158, %s159
      %p171 = scmp.eq.s32.totalorder %s23, 1
      %p172 = por %p170, %p171
      %p174 = scmp.ne.s32.totalorder %s159, %s173
      %p175 = scmp.eq.s32.totalorder %s23, 0
      %p176 = por %p174, %p175
      %s178 = sadd.s32 %s177, 1
      %p181 = scmp.eq.s32.totalorder %s17, 1
      %p182 = scmp.ne.s32.totalorder %s177, %s179
      %p183 = scmp.eq.s32.totalorder %s17, 0
      %p184 = por %p182, %p183
      %p185 = scmp.ne.s32.totalorder %s177, %s179
      %p186 = scmp.eq.s32.totalorder %s22, 1
      %p187 = por %p185, %p186
      %p188 = scmp.ne.s32.totalorder %s179, %s180
      %p189 = scmp.eq.s32.totalorder %s22, 0
      %p190 = por %p188, %p189
      %p191 = scmp.ne.s32.totalorder %s179, %s180
      %p192 = scmp.eq.s32.totalorder %s23, 1
      %p193 = por %p191, %p192
      %p195 = scmp.ne.s32.totalorder %s180, %s194
      %p196 = scmp.eq.s32.totalorder %s23, 0
      %p197 = por %p195, %p196
      %s198 = ssub.s32 %s17, %s24
      %p199 = scmp.eq.s32.totalorder %s198, 0
      %s201 = sadd.s32 %s200, 1
      %s202 = scalar_select %p199, %s200, %s201
      %p205 = pneg %p199
      %p206 = scmp.eq.s32.totalorder %s17, 1
      %p207 = por %p205, %p206
      %p208 = scmp.ne.s32.totalorder %s200, %s203
      %p209 = scmp.eq.s32.totalorder %s17, 0
      %p210 = por %p208, %p209
      %p211 = scmp.ne.s32.totalorder %s200, %s203
      %p212 = scmp.eq.s32.totalorder %s22, 1
      %p213 = por %p211, %p212
      %p214 = scmp.ne.s32.totalorder %s203, %s204
      %p215 = scmp.eq.s32.totalorder %s22, 0
      %p216 = por %p214, %p215
      %p217 = scmp.ne.s32.totalorder %s203, %s204
      %p218 = scmp.eq.s32.totalorder %s23, 1
      %p219 = por %p217, %p218
      %p221 = scmp.ne.s32.totalorder %s204, %s220
      %p222 = scmp.eq.s32.totalorder %s23, 0
      %p223 = por %p221, %p222
      %p224 = scmp.le.s32.totalorder 1, %s17
      %p225 = scmp.lt.s32.totalorder %s17, 3
      %p226 = pnand %p224, %p225
      %p227 = pneg %p226
      // Predicated region
      $region9: #{tpu_custom_call.1} parent=5 // pred_check
        _
      $region10: #{tpu_custom_call.1} parent=5 // pred_check_branch
        %229 = sbr.rel (%p226) target = $region12
      $region11: #{tpu_custom_call.1} parent=5 // pred_region
        %s230 = ssub.s32 %s17, 1
        // Predicated region
        $region13: #{tpu_custom_call.1} parent=11 // pred_check
          %p231 = pneg %p64
        $region14: #{tpu_custom_call.1} parent=11 // pred_check_branch
          %233 = sbr.rel (%p231) target = $region16
        $region15: #{tpu_custom_call.1} parent=11 // pred_region
          _
        $region16: #{tpu_custom_call.1} parent=11 // pred_fallthru
          _
        // Predicated region
        $region17: #{tpu_custom_call.1} parent=11 // pred_check
          %p234 = pneg %p85
        $region18: #{tpu_custom_call.1} parent=11 // pred_check_branch
          %236 = sbr.rel (%p234) target = $region20
        $region19: #{tpu_custom_call.1} parent=11 // pred_region
          _
        $region20: #{tpu_custom_call.1} parent=11 // pred_fallthru
          _
        // Predicated region
        $region21: #{tpu_custom_call.1} parent=11 // pred_check
          %p237 = pneg %p106
        $region22: #{tpu_custom_call.1} parent=11 // pred_check_branch
          %239 = sbr.rel (%p237) target = $region24
        $region23: #{tpu_custom_call.1} parent=11 // pred_region
          _
        $region24: #{tpu_custom_call.1} parent=11 // pred_fallthru
          _
        // Predicated region
        $region25: #{tpu_custom_call.1} parent=11 // pred_check
          %p240 = pneg %p127
        $region26: #{tpu_custom_call.1} parent=11 // pred_check_branch
          %242 = sbr.rel (%p240) target = $region28
        $region27: #{tpu_custom_call.1} parent=11 // pred_region
          _
        $region28: #{tpu_custom_call.1} parent=11 // pred_fallthru
          _
        // Predicated region
        $region29: #{tpu_custom_call.1} parent=11 // pred_check
          %p243 = pneg %p148
        $region30: #{tpu_custom_call.1} parent=11 // pred_check_branch
          %245 = sbr.rel (%p243) target = $region32
        $region31: #{tpu_custom_call.1} parent=11 // pred_region
          _
        $region32: #{tpu_custom_call.1} parent=11 // pred_fallthru
          _
        // Predicated region
        $region33: #{tpu_custom_call.1} parent=11 // pred_check
          %p246 = pneg %p169
        $region34: #{tpu_custom_call.1} parent=11 // pred_check_branch
          %248 = sbr.rel (%p246) target = $region36
        $region35: #{tpu_custom_call.1} parent=11 // pred_region
          _
        $region36: #{tpu_custom_call.1} parent=11 // pred_fallthru
          _
        // Predicated region
        $region37: #{tpu_custom_call.1} parent=11 // pred_check
          %p249 = pneg %p190
        $region38: #{tpu_custom_call.1} parent=11 // pred_check_branch
          %251 = sbr.rel (%p249) target = $region40
        $region39: #{tpu_custom_call.1} parent=11 // pred_region
          _
        $region40: #{tpu_custom_call.1} parent=11 // pred_fallthru
          _
      $region12: #{tpu_custom_call.1} parent=5 // pred_fallthru
        _
      %p252 = scmp.lt.s32.totalorder %s17, 2
      // Predicated region
      $region41: #{tpu_custom_call.1} parent=5 // pred_check
        %p253 = pneg %p252
      $region42: #{tpu_custom_call.1} parent=5 // pred_check_branch
        %255 = sbr.rel (%p253) target = $region44
      $region43: #{tpu_custom_call.1} parent=5 // pred_region
        // Predicated region
        $region45: #{tpu_custom_call.1} parent=43 // pred_check
          %p256 = pneg %p37
        $region46: #{tpu_custom_call.1} parent=43 // pred_check_branch
          %258 = sbr.rel (%p256) target = $region48
        $region47: #{tpu_custom_call.1} parent=43 // pred_region
          %s259 = smul.u32 2, %s17
          %p260 = scmp.lt.s32.totalorder %s259, 3
          %s261 = scalar_select %p260, %s259, 3
          %s262 = smul.addr %s261, 4
          %s263 = smul.addr %s262, 4
          %s264 = scalar_lea.vmem %s0, %s263
          %s265 = smul.u32 2, %s17
        $region48: #{tpu_custom_call.1} parent=43 // pred_fallthru
          _
      $region44: #{tpu_custom_call.1} parent=5 // pred_fallthru
        _
      %p266 = scmp.le.s32.totalorder 1, %s17
      %p267 = scmp.lt.s32.totalorder %s17, 3
      %p268 = pnand %p266, %p267
      %p269 = pneg %p268
      // Predicated region
      $region49: #{tpu_custom_call.1} parent=5 // pred_check
        _
      $region50: #{tpu_custom_call.1} parent=5 // pred_check_branch
        %271 = sbr.rel (%p268) target = $region52
      $region51: #{tpu_custom_call.1} parent=5 // pred_region
        %s272 = ssub.s32 %s17, 1
        %s273 = smul.u32 2, %s22
        %p274 = scmp.lt.s32.totalorder %s273, 3
        %s275 = scalar_select %p274, %s273, 3
        %s276 = smul.addr %s275, 4
        %s277 = smul.addr %s276, 4
        %s278 = scalar_lea.vmem %s0, %s277
        %p279 = pneg %p43
        %p280 = pneg %p40
        %p281 = pneg %p64
        %p282 = pneg %p61
        %p283 = pneg %p85
        %p284 = pneg %p82
        %p285 = pneg %p106
        %p286 = pneg %p103
        %p287 = pneg %p127
        %p288 = pneg %p124
        %p289 = pneg %p148
        %p290 = pneg %p145
        %p291 = pneg %p169
        %p292 = pneg %p166
        %p293 = pneg %p190
        %p294 = pneg %p187
        %p295 = pneg %p216
        %p296 = pneg %p213
        %s297 = sand.u32 %s203, 1
        %s298 = scalar_lea.sflag [#allocation4], %s297
        %s299 = sand.u32 %s203, 1
        %s300 = smul.addr %s299, 32
        %s301 = scalar_lea.vmem [#allocation3], %s300
        %s302 = smul.u32 2, %s22
        %p303 = scmp.lt.s32.totalorder %s302, 3
        %s304 = scalar_select %p303, %s302, 3
        %s305 = smul.addr %s304, 4
        %s306 = smul.addr %s305, 4
        %s307 = scalar_lea.vmem %s0, %s306
        %s308 = smul.u32 2, %s22
        %s309 = smul.u32 2, %s22
        %v311 = vld [vmem:[%s307] sm:$0xff]
        %v312 = vld [vmem:[%s307 + $0x8] sm:$0xff]
        %v313 = vld [vmem:[%s307 + $0x10] sm:$0xff]
        %v314 = vld [vmem:[%s307 + $0x18] sm:$0xff]
        %v315 = vld [vmem:[%s1] sm:$0xf]
        %v316 = vld [vmem:[%s1 + $0x4] sm:$0xf]
        %v317 = vld [vmem:[%s1 + $0x8] sm:$0xf]
        %v318 = vld [vmem:[%s1 + $0xc] sm:$0xf]
        %v319 = vld [vmem:[%s1 + $0x10] sm:$0xf]
        %v320 = vld [vmem:[%s1 + $0x14] sm:$0xf]
        %v321 = vld [vmem:[%s1 + $0x18] sm:$0xf]
        %v322 = vld [vmem:[%s1 + $0x1c] sm:$0xf]
        %v323 = vld [vmem:[%s1 + $0x20] sm:$0xf]
        %v324 = vld [vmem:[%s1 + $0x24] sm:$0xf]
        %v325 = vld [vmem:[%s1 + $0x28] sm:$0xf]
        %v326 = vld [vmem:[%s1 + $0x2c] sm:$0xf]
        %v327 = vld [vmem:[%s1 + $0x30] sm:$0xf]
        %v328 = vld [vmem:[%s1 + $0x34] sm:$0xf]
        %v329 = vld [vmem:[%s1 + $0x38] sm:$0xf]
        %v330 = vld [vmem:[%s1 + $0x3c] sm:$0xf]
        %v331 = vld [vmem:[%s1 + $0x40] sm:$0xf]
        %v332 = vld [vmem:[%s1 + $0x44] sm:$0xf]
        %v333 = vld [vmem:[%s1 + $0x48] sm:$0xf]
        %v334 = vld [vmem:[%s1 + $0x4c] sm:$0xf]
        %v335 = vld [vmem:[%s1 + $0x50] sm:$0xf]
        %v336 = vld [vmem:[%s1 + $0x54] sm:$0xf]
        %v337 = vld [vmem:[%s1 + $0x58] sm:$0xf]
        %v338 = vld [vmem:[%s1 + $0x5c] sm:$0xf]
        %v339 = vld [vmem:[%s1 + $0x60] sm:$0xf]
        %v340 = vld [vmem:[%s1 + $0x64] sm:$0xf]
        %v341 = vld [vmem:[%s1 + $0x68] sm:$0xf]
        %v342 = vld [vmem:[%s1 + $0x6c] sm:$0xf]
        %v343 = vld [vmem:[%s1 + $0x70] sm:$0xf]
        %v344 = vld [vmem:[%s1 + $0x74] sm:$0xf]
        %v345 = vld [vmem:[%s1 + $0x78] sm:$0xf]
        %v346 = vld [vmem:[%s1 + $0x7c] sm:$0xf]
        %v351 = vunpack.c.l.b16 %v311
        %v352 = vunpack.c.h.b16 %v311
        %v353 = vunpack.c.l.b16 %v312
        %v354 = vunpack.c.h.b16 %v312
        %v355 = vunpack.c.l.b16 %v313
        %v356 = vunpack.c.h.b16 %v313
        %v357 = vunpack.c.l.b16 %v314
        %v358 = vunpack.c.h.b16 %v314
        %v359 = vpack.c.b16 %v353, %v351
        %v360 = vpack.c.b16 %v354, %v352
        %v361 = vpack.c.b16 %v357, %v355
        %v362 = vpack.c.b16 %v358, %v356
        %v399 = vunpack.c.l.b16 %v315
        %v400 = vunpack.c.l.b16 %v316
        %v401 = vunpack.c.l.b16 %v317
        %v402 = vunpack.c.l.b16 %v318
        %v403 = vunpack.c.l.b16 %v319
        %v404 = vunpack.c.l.b16 %v320
        %v405 = vunpack.c.l.b16 %v321
        %v406 = vunpack.c.l.b16 %v322
        %v407 = vunpack.c.l.b16 %v323
        %v408 = vunpack.c.l.b16 %v324
        %v409 = vunpack.c.l.b16 %v325
        %v410 = vunpack.c.l.b16 %v326
        %v411 = vunpack.c.l.b16 %v327
        %v412 = vunpack.c.l.b16 %v328
        %v413 = vunpack.c.l.b16 %v329
        %v414 = vunpack.c.l.b16 %v330
        %v415 = vunpack.c.l.b16 %v331
        %v416 = vunpack.c.l.b16 %v332
        %v417 = vunpack.c.l.b16 %v333
        %v418 = vunpack.c.l.b16 %v334
        %v419 = vunpack.c.l.b16 %v335
        %v420 = vunpack.c.l.b16 %v336
        %v421 = vunpack.c.l.b16 %v337
        %v422 = vunpack.c.l.b16 %v338
        %v423 = vunpack.c.l.b16 %v339
        %v424 = vunpack.c.l.b16 %v340
        %v425 = vunpack.c.l.b16 %v341
        %v426 = vunpack.c.l.b16 %v342
        %v427 = vunpack.c.l.b16 %v343
        %v428 = vunpack.c.l.b16 %v344
        %v429 = vunpack.c.l.b16 %v345
        %v430 = vunpack.c.l.b16 %v346
        %v431 = vpack.c.b16 %v400, %v399
        %v432 = vpack.c.b16 %v402, %v401
        %v433 = vpack.c.b16 %v404, %v403
        %v434 = vpack.c.b16 %v406, %v405
        %v435 = vpack.c.b16 %v408, %v407
        %v436 = vpack.c.b16 %v410, %v409
        %v437 = vpack.c.b16 %v412, %v411
        %v438 = vpack.c.b16 %v414, %v413
        %v439 = vpack.c.b16 %v416, %v415
        %v440 = vpack.c.b16 %v418, %v417
        %v441 = vpack.c.b16 %v420, %v419
        %v442 = vpack.c.b16 %v422, %v421
        %v443 = vpack.c.b16 %v424, %v423
        %v444 = vpack.c.b16 %v426, %v425
        %v445 = vpack.c.b16 %v428, %v427
        %v446 = vpack.c.b16 %v430, %v429
        %463 = vmatprep.subr.bf16.mxu0 0
        %464 = vmatpush1.bf16.msra.mxu0 %v431
        %465 = vmatprep.subr.bf16.mxu0 0
        %466 = vmatpush1.bf16.msra.mxu0 %v432
        %467 = vmatprep.subr.bf16.mxu0 0
        %468 = vmatpush1.bf16.msra.mxu0 %v433
        %469 = vmatprep.subr.bf16.mxu0 0
        %470 = vmatpush1.bf16.msra.mxu0 %v434
        %471 = vmatprep.subr.bf16.mxu0 0
        %472 = vmatpush1.bf16.msra.mxu0 %v435
        %473 = vmatprep.subr.bf16.mxu0 0
        %474 = vmatpush1.bf16.msra.mxu0 %v436
        %475 = vmatprep.subr.bf16.mxu0 0
        %476 = vmatpush1.bf16.msra.mxu0 %v437
        %477 = vmatprep.subr.bf16.mxu0 0
        %478 = vmatpush1.bf16.msra.mxu0 %v438
        %479 = vmatprep.subr.bf16.mxu0 0
        %480 = vmatpush1.bf16.msra.mxu0 %v439
        %481 = vmatprep.subr.bf16.mxu0 0
        %482 = vmatpush1.bf16.msra.mxu0 %v440
        %483 = vmatprep.subr.bf16.mxu0 0
        %484 = vmatpush1.bf16.msra.mxu0 %v441
        %485 = vmatprep.subr.bf16.mxu0 0
        %486 = vmatpush1.bf16.msra.mxu0 %v442
        %487 = vmatprep.subr.bf16.mxu0 0
        %488 = vmatpush1.bf16.msra.mxu0 %v443
        %489 = vmatprep.subr.bf16.mxu0 0
        %490 = vmatpush1.bf16.msra.mxu0 %v444
        %491 = vmatprep.subr.bf16.mxu0 0
        %492 = vmatpush1.bf16.msra.mxu0 %v445
        %493 = vmatprep.subr.bf16.mxu0 0
        %494 = vmatpush1.bf16.msra.mxu0 %v446
        %495 = vmatprep.mubr.bf16.mxu0 %v360
        %496 = vmatmul.mubr.bf16.gmra.mrb[0].mxu0 %v359
        %v497 = vpop.f32.mrb[0].mxu0
        %v498 = vadd.f32 0.0, %v497
        %v499 = vpop.f32.mrb[0].mxu0
        %v500 = vpop.f32.mrb[0].mxu0
        %v501 = vadd.f32 0.0, %v500
        %v502 = vpop.f32.mrb[0].mxu0
        %503 = vmatprep.mubr.bf16.mxu0 %v362
        %504 = vmatmul.mubr.bf16.gmra.mrb[0].mxu0 %v361
        %v505 = vpop.f32.mrb[0].mxu0
        %v506 = vadd.f32 0.0, %v505
        %v507 = vpop.f32.mrb[0].mxu0
        %v508 = vpop.f32.mrb[0].mxu0
        %v509 = vadd.f32 0.0, %v508
        %v510 = vpop.f32.mrb[0].mxu0
        %511 = vdwg.mxu0
        %v512 = vpack.c.bf16 %v501, %v498
        %v513 = vpack.c.bf16 %v509, %v506
        %v514 = vld [vmem:[%s3] sm:$0xf]
        %v515 = vld [vmem:[%s3 + $0x4] sm:$0xf]
        %v518 = vunpack.c.l.b16 %v514
        %v519 = vunpack.c.l.b16 %v515
        %v520 = vpack.c.b16 %v519, %v518
        %vm521 = vcmask 130048
        %v523 = vsel %vm521, %v520, 0
        %525 = vmatprep.subr.bf16.mxu0 0
        %526 = vmatpush1.bf16.msra.mxu0 %v512
        %527 = vmatprep.subr.bf16.mxu0 0
        %528 = vmatpush1.bf16.msra.mxu0 0
        %529 = vmatprep.subr.bf16.mxu0 0
        %530 = vmatpush1.bf16.msra.mxu0 0
        %531 = vmatprep.subr.bf16.mxu0 0
        %532 = vmatpush1.bf16.msra.mxu0 0
        %533 = vmatprep.subr.bf16.mxu0 0
        %534 = vmatpush1.bf16.msra.mxu0 0
        %535 = vmatprep.subr.bf16.mxu0 0
        %536 = vmatpush1.bf16.msra.mxu0 0
        %537 = vmatprep.subr.bf16.mxu0 0
        %538 = vmatpush1.bf16.msra.mxu0 0
        %539 = vmatprep.subr.bf16.mxu0 0
        %540 = vmatpush1.bf16.msra.mxu0 0
        %541 = vmatprep.subr.bf16.mxu0 0
        %542 = vmatpush1.bf16.msra.mxu0 0
        %543 = vmatprep.subr.bf16.mxu0 0
        %544 = vmatpush1.bf16.msra.mxu0 0
        %545 = vmatprep.subr.bf16.mxu0 0
        %546 = vmatpush1.bf16.msra.mxu0 0
        %547 = vmatprep.subr.bf16.mxu0 0
        %548 = vmatpush1.bf16.msra.mxu0 0
        %549 = vmatprep.subr.bf16.mxu0 0
        %550 = vmatpush1.bf16.msra.mxu0 0
        %551 = vmatprep.subr.bf16.mxu0 0
        %552 = vmatpush1.bf16.msra.mxu0 0
        %553 = vmatprep.subr.bf16.mxu0 0
        %554 = vmatpush1.bf16.msra.mxu0 0
        %555 = vmatprep.subr.bf16.mxu0 0
        %556 = vmatpush1.bf16.msra.mxu0 0
        %557 = vmatprep.mubr.bf16.mxu0 0
        %558 = vmatmul.mubr.bf16.gmra.mrb[0].mxu0 %v523
        %v559 = vpop.f32.mrb[0].mxu0
        %v560 = vadd.f32 0.0, %v559
        %v561 = vpop.f32.mrb[0].mxu0
        %v562 = vpop.f32.mrb[0].mxu0
        %v563 = vadd.f32 0.0, %v562
        %v564 = vpop.f32.mrb[0].mxu0
        %565 = vdwg.mxu0
        %v566 = vld [vmem:[%s4] sm:$0xff]
        %v567 = vld [vmem:[%s4 + $0x8] sm:$0xff]
        %v568 = vmul.f32 %v560, %v566
        %v569 = vmul.f32 %v563, %v567
        %v570 = vpack.c.bf16 %v569, %v568
        %v571 = vld [vmem:[%s6] sm:$0xf]
        %v573 = vsel %vm521, %v571, 0
        %575 = vmatprep.subr.bf16.mxu0 0
        %576 = vmatpush1.bf16.msra.mxu0 %v570
        %577 = vmatprep.subr.bf16.mxu0 0
        %578 = vmatpush1.bf16.msra.mxu0 0
        %579 = vmatprep.subr.bf16.mxu0 0
        %580 = vmatpush1.bf16.msra.mxu0 0
        %581 = vmatprep.subr.bf16.mxu0 0
        %582 = vmatpush1.bf16.msra.mxu0 0
        %583 = vmatprep.subr.bf16.mxu0 0
        %584 = vmatpush1.bf16.msra.mxu0 0
        %585 = vmatprep.subr.bf16.mxu0 0
        %586 = vmatpush1.bf16.msra.mxu0 0
        %587 = vmatprep.subr.bf16.mxu0 0
        %588 = vmatpush1.bf16.msra.mxu0 0
        %589 = vmatprep.subr.bf16.mxu0 0
        %590 = vmatpush1.bf16.msra.mxu0 0
        %591 = vmatprep.subr.bf16.mxu0 0
        %592 = vmatpush1.bf16.msra.mxu0 0
        %593 = vmatprep.subr.bf16.mxu0 0
        %594 = vmatpush1.bf16.msra.mxu0 0
        %595 = vmatprep.subr.bf16.mxu0 0
        %596 = vmatpush1.bf16.msra.mxu0 0
        %597 = vmatprep.subr.bf16.mxu0 0
        %598 = vmatpush1.bf16.msra.mxu0 0
        %599 = vmatprep.subr.bf16.mxu0 0
        %600 = vmatpush1.bf16.msra.mxu0 0
        %601 = vmatprep.subr.bf16.mxu0 0
        %602 = vmatpush1.bf16.msra.mxu0 0
        %603 = vmatprep.subr.bf16.mxu0 0
        %604 = vmatpush1.bf16.msra.mxu0 0
        %605 = vmatprep.subr.bf16.mxu0 0
        %606 = vmatpush1.bf16.msra.mxu0 0
        %607 = vmatprep.mubr.bf16.mxu0 0
        %608 = vmatmul.mubr.bf16.gmra.mrb[0].mxu0 %v573
        %v609 = vpop.f32.mrb[0].mxu0
        %v610 = vadd.f32 0.0, %v609
        %v611 = vpop.f32.mrb[0].mxu0
        %v612 = vpop.f32.mrb[0].mxu0
        %v613 = vpop.f32.mrb[0].mxu0
        %614 = vdwg.mxu0
        %v615 = vpack.c.bf16 %v610, %v610
        %vm616 = vcmask 519168
        %617 = vst.msk [vmem:[#allocation2] sm:$0xf] %vm616, %v615
        %v618 = vld [vmem:[%s3] sm:$0xf]
        %v619 = vld [vmem:[%s3 + $0x4] sm:$0xf]
        %v622 = vunpack.c.l.b16 %v618
        %v623 = vunpack.c.l.b16 %v619
        %v624 = vpack.c.b16 %v623, %v622
        %v626 = vsel %vm521, %v624, 0
        %628 = vmatprep.subr.bf16.mxu0 0
        %629 = vmatpush1.bf16.msra.mxu0 %v513
        %630 = vmatprep.subr.bf16.mxu0 0
        %631 = vmatpush1.bf16.msra.mxu0 0
        %632 = vmatprep.subr.bf16.mxu0 0
        %633 = vmatpush1.bf16.msra.mxu0 0
        %634 = vmatprep.subr.bf16.mxu0 0
        %635 = vmatpush1.bf16.msra.mxu0 0
        %636 = vmatprep.subr.bf16.mxu0 0
        %637 = vmatpush1.bf16.msra.mxu0 0
        %638 = vmatprep.subr.bf16.mxu0 0
        %639 = vmatpush1.bf16.msra.mxu0 0
        %640 = vmatprep.subr.bf16.mxu0 0
        %641 = vmatpush1.bf16.msra.mxu0 0
        %642 = vmatprep.subr.bf16.mxu0 0
        %643 = vmatpush1.bf16.msra.mxu0 0
        %644 = vmatprep.subr.bf16.mxu0 0
        %645 = vmatpush1.bf16.msra.mxu0 0
        %646 = vmatprep.subr.bf16.mxu0 0
        %647 = vmatpush1.bf16.msra.mxu0 0
        %648 = vmatprep.subr.bf16.mxu0 0
        %649 = vmatpush1.bf16.msra.mxu0 0
        %650 = vmatprep.subr.bf16.mxu0 0
        %651 = vmatpush1.bf16.msra.mxu0 0
        %652 = vmatprep.subr.bf16.mxu0 0
        %653 = vmatpush1.bf16.msra.mxu0 0
        %654 = vmatprep.subr.bf16.mxu0 0
        %655 = vmatpush1.bf16.msra.mxu0 0
        %656 = vmatprep.subr.bf16.mxu0 0
        %657 = vmatpush1.bf16.msra.mxu0 0
        %658 = vmatprep.subr.bf16.mxu0 0
        %659 = vmatpush1.bf16.msra.mxu0 0
        %660 = vmatprep.mubr.bf16.mxu0 0
        %661 = vmatmul.mubr.bf16.gmra.mrb[0].mxu0 %v626
        %v662 = vpop.f32.mrb[0].mxu0
        %v663 = vadd.f32 0.0, %v662
        %v664 = vpop.f32.mrb[0].mxu0
        %v665 = vpop.f32.mrb[0].mxu0
        %v666 = vadd.f32 0.0, %v665
        %v667 = vpop.f32.mrb[0].mxu0
        %668 = vdwg.mxu0
        %v669 = vld [vmem:[%s4] sm:$0xff]
        %v670 = vld [vmem:[%s4 + $0x8] sm:$0xff]
        %v671 = vmul.f32 %v663, %v669
        %v672 = vmul.f32 %v666, %v670
        %v673 = vpack.c.bf16 %v672, %v671
        %v674 = vld [vmem:[%s6] sm:$0xf]
        %v676 = vsel %vm521, %v674, 0
        %678 = vmatprep.subr.bf16.mxu0 0
        %679 = vmatpush1.bf16.msra.mxu0 %v673
        %680 = vmatprep.subr.bf16.mxu0 0
        %681 = vmatpush1.bf16.msra.mxu0 0
        %682 = vmatprep.subr.bf16.mxu0 0
        %683 = vmatpush1.bf16.msra.mxu0 0
        %684 = vmatprep.subr.bf16.mxu0 0
        %685 = vmatpush1.bf16.msra.mxu0 0
        %686 = vmatprep.subr.bf16.mxu0 0
        %687 = vmatpush1.bf16.msra.mxu0 0
        %688 = vmatprep.subr.bf16.mxu0 0
        %689 = vmatpush1.bf16.msra.mxu0 0
        %690 = vmatprep.subr.bf16.mxu0 0
        %691 = vmatpush1.bf16.msra.mxu0 0
        %692 = vmatprep.subr.bf16.mxu0 0
        %693 = vmatpush1.bf16.msra.mxu0 0
        %694 = vmatprep.subr.bf16.mxu0 0
        %695 = vmatpush1.bf16.msra.mxu0 0
        %696 = vmatprep.subr.bf16.mxu0 0
        %697 = vmatpush1.bf16.msra.mxu0 0
        %698 = vmatprep.subr.bf16.mxu0 0
        %699 = vmatpush1.bf16.msra.mxu0 0
        %700 = vmatprep.subr.bf16.mxu0 0
        %701 = vmatpush1.bf16.msra.mxu0 0
        %702 = vmatprep.subr.bf16.mxu0 0
        %703 = vmatpush1.bf16.msra.mxu0 0
        %704 = vmatprep.subr.bf16.mxu0 0
        %705 = vmatpush1.bf16.msra.mxu0 0
        %706 = vmatprep.subr.bf16.mxu0 0
        %707 = vmatpush1.bf16.msra.mxu0 0
        %708 = vmatprep.subr.bf16.mxu0 0
        %709 = vmatpush1.bf16.msra.mxu0 0
        %710 = vmatprep.mubr.bf16.mxu0 0
        %711 = vmatmul.mubr.bf16.gmra.mrb[0].mxu0 %v676
        %v712 = vpop.f32.mrb[0].mxu0
        %v713 = vadd.f32 0.0, %v712
        %v714 = vpop.f32.mrb[0].mxu0
        %v715 = vpop.f32.mrb[0].mxu0
        %v716 = vpop.f32.mrb[0].mxu0
        %717 = vdwg.mxu0
        %v718 = vpack.c.bf16 %v713, %v713
        %v720 = vrot.slane %v718, 4
        %vm722 = vcmask 523268
        %723 = vst.msk [vmem:[#allocation2] sm:$0xf0] %vm722, %v720
        %v724 = vld [vmem:[#allocation2] sm:$0xff]
        %v725 = vld [vmem:[%s2] sm:$0xff]
        %v726 = vld [vmem:[%s2 + $0x8] sm:$0xff]
        %v727 = vld [vmem:[%s2 + $0x10] sm:$0xff]
        %v728 = vld [vmem:[%s2 + $0x18] sm:$0xff]
        %v729 = vld [vmem:[%s2 + $0x20] sm:$0xff]
        %v730 = vld [vmem:[%s2 + $0x28] sm:$0xff]
        %v731 = vld [vmem:[%s2 + $0x30] sm:$0xff]
        %v732 = vld [vmem:[%s2 + $0x38] sm:$0xff]
        %v741 = vunpack.c.l.b16 %v725
        %v742 = vunpack.c.h.b16 %v725
        %v743 = vunpack.c.l.b16 %v726
        %v744 = vunpack.c.h.b16 %v726
        %v745 = vunpack.c.l.b16 %v727
        %v746 = vunpack.c.h.b16 %v727
        %v747 = vunpack.c.l.b16 %v728
        %v748 = vunpack.c.h.b16 %v728
        %v749 = vunpack.c.l.b16 %v729
        %v750 = vunpack.c.h.b16 %v729
        %v751 = vunpack.c.l.b16 %v730
        %v752 = vunpack.c.h.b16 %v730
        %v753 = vunpack.c.l.b16 %v731
        %v754 = vunpack.c.h.b16 %v731
        %v755 = vunpack.c.l.b16 %v732
        %v756 = vunpack.c.h.b16 %v732
        %v757 = vpack.c.b16 %v743, %v741
        %v758 = vpack.c.b16 %v744, %v742
        %v759 = vpack.c.b16 %v747, %v745
        %v760 = vpack.c.b16 %v748, %v746
        %v761 = vpack.c.b16 %v751, %v749
        %v762 = vpack.c.b16 %v752, %v750
        %v763 = vpack.c.b16 %v755, %v753
        %v764 = vpack.c.b16 %v756, %v754
        %vm773 = vcmask 523264
        %v775 = vsel %vm773, %v724, 0
        %777 = vmatprep.subr.bf16.mxu0 %v758
        %778 = vmatpush1.bf16.msra.mxu0 %v757
        %779 = vmatprep.subr.bf16.mxu0 %v760
        %780 = vmatpush1.bf16.msra.mxu0 %v759
        %781 = vmatprep.subr.bf16.mxu0 %v762
        %782 = vmatpush1.bf16.msra.mxu0 %v761
        %783 = vmatprep.subr.bf16.mxu0 %v764
        %784 = vmatpush1.bf16.msra.mxu0 %v763
        %785 = vmatprep.subr.bf16.mxu0 0
        %786 = vmatpush1.bf16.msra.mxu0 0
        %787 = vmatprep.subr.bf16.mxu0 0
        %788 = vmatpush1.bf16.msra.mxu0 0
        %789 = vmatprep.subr.bf16.mxu0 0
        %790 = vmatpush1.bf16.msra.mxu0 0
        %791 = vmatprep.subr.bf16.mxu0 0
        %792 = vmatpush1.bf16.msra.mxu0 0
        %793 = vmatprep.subr.bf16.mxu0 0
        %794 = vmatpush1.bf16.msra.mxu0 0
        %795 = vmatprep.subr.bf16.mxu0 0
        %796 = vmatpush1.bf16.msra.mxu0 0
        %797 = vmatprep.subr.bf16.mxu0 0
        %798 = vmatpush1.bf16.msra.mxu0 0
        %799 = vmatprep.subr.bf16.mxu0 0
        %800 = vmatpush1.bf16.msra.mxu0 0
        %801 = vmatprep.subr.bf16.mxu0 0
        %802 = vmatpush1.bf16.msra.mxu0 0
        %803 = vmatprep.subr.bf16.mxu0 0
        %804 = vmatpush1.bf16.msra.mxu0 0
        %805 = vmatprep.subr.bf16.mxu0 0
        %806 = vmatpush1.bf16.msra.mxu0 0
        %807 = vmatprep.subr.bf16.mxu0 0
        %808 = vmatpush1.bf16.msra.mxu0 0
        %809 = vmatprep.mubr.bf16.mxu0 0
        %810 = vmatmul.mubr.bf16.gmra.mrb[0].mxu0 %v775
        %v811 = vpop.f32.mrb[0].mxu0
        %v812 = vadd.f32 0.0, %v811
        %v813 = vpop.f32.mrb[0].mxu0
        %v814 = vadd.f32 0.0, %v813
        %v815 = vpop.f32.mrb[0].mxu0
        %v816 = vadd.f32 0.0, %v815
        %v817 = vpop.f32.mrb[0].mxu0
        %v818 = vadd.f32 0.0, %v817
        %819 = vdwg.mxu0
        %v820 = vld [vmem:[%s5] sm:$0xf]
        %v821 = vld [vmem:[%s307] sm:$0xff]
        %v822 = vld [vmem:[%s307 + $0x8] sm:$0xff]
        %v825 = vunpack.c.l.b16 %v821
        %v826 = vunpack.c.h.b16 %v821
        %v827 = vunpack.c.l.b16 %v822
        %v828 = vunpack.c.h.b16 %v822
        %v829 = vpack.c.b16 %v827, %v825
        %v830 = vpack.c.b16 %v828, %v826
        %v834 = vsel %vm521, %v820, 0
        %836 = vmatprep.subr.bf16.mxu0 %v830
        %837 = vmatpush1.bf16.msra.mxu0 %v829
        %838 = vmatprep.subr.bf16.mxu0 0
        %839 = vmatpush1.bf16.msra.mxu0 0
        %840 = vmatprep.subr.bf16.mxu0 0
        %841 = vmatpush1.bf16.msra.mxu0 0
        %842 = vmatprep.subr.bf16.mxu0 0
        %843 = vmatpush1.bf16.msra.mxu0 0
        %844 = vmatprep.subr.bf16.mxu0 0
        %845 = vmatpush1.bf16.msra.mxu0 0
        %846 = vmatprep.subr.bf16.mxu0 0
        %847 = vmatpush1.bf16.msra.mxu0 0
        %848 = vmatprep.subr.bf16.mxu0 0
        %849 = vmatpush1.bf16.msra.mxu0 0
        %850 = vmatprep.subr.bf16.mxu0 0
        %851 = vmatpush1.bf16.msra.mxu0 0
        %852 = vmatprep.subr.bf16.mxu0 0
        %853 = vmatpush1.bf16.msra.mxu0 0
        %854 = vmatprep.subr.bf16.mxu0 0
        %855 = vmatpush1.bf16.msra.mxu0 0
        %856 = vmatprep.subr.bf16.mxu0 0
        %857 = vmatpush1.bf16.msra.mxu0 0
        %858 = vmatprep.subr.bf16.mxu0 0
        %859 = vmatpush1.bf16.msra.mxu0 0
        %860 = vmatprep.subr.bf16.mxu0 0
        %861 = vmatpush1.bf16.msra.mxu0 0
        %862 = vmatprep.subr.bf16.mxu0 0
        %863 = vmatpush1.bf16.msra.mxu0 0
        %864 = vmatprep.subr.bf16.mxu0 0
        %865 = vmatpush1.bf16.msra.mxu0 0
        %866 = vmatprep.subr.bf16.mxu0 0
        %867 = vmatpush1.bf16.msra.mxu0 0
        %868 = vmatprep.mubr.bf16.mxu0 0
        %869 = vmatmul.mubr.bf16.gmra.mrb[0].mxu0 %v834
        %v870 = vpop.f32.mrb[0].mxu0
        %v871 = vadd.f32 %v812, %v870
        %v872 = vpop.f32.mrb[0].mxu0
        %v873 = vadd.f32 %v814, %v872
        %v874 = vpop.f32.mrb[0].mxu0
        %v875 = vpop.f32.mrb[0].mxu0
        %876 = vdwg.mxu0
        %v877 = vld [vmem:[%s7] sm:$0xff]
        %879 = vset.pattern.permute.xlu0 0
        %880 = vperm.xlu0 %879, %v877
        %v881 = vpop.permute.xlu0 %880
        %v883 = vadd.f32 %v871, %v881
        %v884 = vadd.f32 %v873, %v881
        %885 = vst [vmem:[%s301] sm:$0xff] %v883
        %886 = vst [vmem:[%s301 + $0x8] sm:$0xff] %v884
        %v887 = vld [vmem:[%s5] sm:$0xf]
        %s888 = scalar_lea.vmem %s307, 16
        %v889 = vld [vmem:[%s888] sm:$0xff]
        %v890 = vld [vmem:[%s888 + $0x8] sm:$0xff]
        %v893 = vunpack.c.l.b16 %v889
        %v894 = vunpack.c.h.b16 %v889
        %v895 = vunpack.c.l.b16 %v890
        %v896 = vunpack.c.h.b16 %v890
        %v897 = vpack.c.b16 %v895, %v893
        %v898 = vpack.c.b16 %v896, %v894
        %v902 = vsel %vm521, %v887, 0
        %904 = vmatprep.subr.bf16.mxu0 %v898
        %905 = vmatpush1.bf16.msra.mxu0 %v897
        %906 = vmatprep.subr.bf16.mxu0 0
        %907 = vmatpush1.bf16.msra.mxu0 0
        %908 = vmatprep.subr.bf16.mxu0 0
        %909 = vmatpush1.bf16.msra.mxu0 0
        %910 = vmatprep.subr.bf16.mxu0 0
        %911 = vmatpush1.bf16.msra.mxu0 0
        %912 = vmatprep.subr.bf16.mxu0 0
        %913 = vmatpush1.bf16.msra.mxu0 0
        %914 = vmatprep.subr.bf16.mxu0 0
        %915 = vmatpush1.bf16.msra.mxu0 0
        %916 = vmatprep.subr.bf16.mxu0 0
        %917 = vmatpush1.bf16.msra.mxu0 0
        %918 = vmatprep.subr.bf16.mxu0 0
        %919 = vmatpush1.bf16.msra.mxu0 0
        %920 = vmatprep.subr.bf16.mxu0 0
        %921 = vmatpush1.bf16.msra.mxu0 0
        %922 = vmatprep.subr.bf16.mxu0 0
        %923 = vmatpush1.bf16.msra.mxu0 0
        %924 = vmatprep.subr.bf16.mxu0 0
        %925 = vmatpush1.bf16.msra.mxu0 0
        %926 = vmatprep.subr.bf16.mxu0 0
        %927 = vmatpush1.bf16.msra.mxu0 0
        %928 = vmatprep.subr.bf16.mxu0 0
        %929 = vmatpush1.bf16.msra.mxu0 0
        %930 = vmatprep.subr.bf16.mxu0 0
        %931 = vmatpush1.bf16.msra.mxu0 0
        %932 = vmatprep.subr.bf16.mxu0 0
        %933 = vmatpush1.bf16.msra.mxu0 0
        %934 = vmatprep.subr.bf16.mxu0 0
        %935 = vmatpush1.bf16.msra.mxu0 0
        %936 = vmatprep.mubr.bf16.mxu0 0
        %937 = vmatmul.mubr.bf16.gmra.mrb[0].mxu0 %v902
        %v938 = vpop.f32.mrb[0].mxu0
        %v939 = vadd.f32 %v816, %v938
        %v940 = vpop.f32.mrb[0].mxu0
        %v941 = vadd.f32 %v818, %v940
        %v942 = vpop.f32.mrb[0].mxu0
        %v943 = vpop.f32.mrb[0].mxu0
        %944 = vdwg.mxu0
        %v945 = vld [vmem:[%s7] sm:$0xff]
        %947 = vset.pattern.permute.xlu0 0
        %948 = vperm.xlu0 %947, %v945
        %v949 = vpop.permute.xlu0 %948
        %v951 = vadd.f32 %v939, %v949
        %v952 = vadd.f32 %v941, %v949
        %s953 = scalar_lea.vmem %s301, 16 [#allocation3]
        %954 = vst [vmem:[%s953] sm:$0xff] %v951
        %955 = vst [vmem:[%s953 + $0x8] sm:$0xff] %v952
        %s956 = sand.u32 %s203, 1
        %s957 = scalar_lea.sflag [#allocation4], %s956
        %s958 = sand.u32 %s203, 1
        %s959 = smul.addr %s958, 32
        %s960 = scalar_lea.vmem [#allocation3], %s959
        // Predicated region
        $region53: #{tpu_custom_call.1} parent=51 // pred_check
          %p961 = pneg %p213
        $region54: #{tpu_custom_call.1} parent=51 // pred_check_branch
          %963 = sbr.rel (%p961) target = $region56
        $region55: #{tpu_custom_call.1} parent=51 // pred_region
          %s964 = smul.u32 2, %s22
          %s966 = ssub.s32 512, 512
          %967 = vsyncadd %s957, %s966
          %s968 = smul.addr %s964, 2
          %s969 = smul.addr %s968, 128
          %s970 = scalar_lea.hbm %s8, %s969
          %s971 = sshll.u32 %s960, 4
          %s972 = int_to_ptr.vmem [resolvable:$true] %s971
          %977 = dma.vmem_to_hbm [thread:$0]  %s972, 512, %s970, %s957, 256, 256, 16
        $region56: #{tpu_custom_call.1} parent=51 // pred_fallthru
          _
      $region52: #{tpu_custom_call.1} parent=5 // pred_fallthru
        _
      %p978 = scmp.le.s32.totalorder 2, %s17
      // Predicated region
      $region57: #{tpu_custom_call.1} parent=5 // pred_check
        %p979 = pneg %p978
      $region58: #{tpu_custom_call.1} parent=5 // pred_check_branch
        %981 = sbr.rel (%p979) target = $region60
      $region59: #{tpu_custom_call.1} parent=5 // pred_region
        %s982 = ssub.s32 %s17, 2
        // Predicated region
        $region61: #{tpu_custom_call.1} parent=59 // pred_check
          %p983 = pneg %p219
        $region62: #{tpu_custom_call.1} parent=59 // pred_check_branch
          %985 = sbr.rel (%p983) target = $region64
        $region63: #{tpu_custom_call.1} parent=59 // pred_region
          %s986 = sand.u32 %s204, 1
          %s987 = scalar_lea.sflag [#allocation4], %s986
          %s988 = sand.u32 %s204, 1
          %s989 = smul.addr %s988, 32
          %s990 = scalar_lea.vmem [#allocation3], %s989
          %991 = dma.done %s987, 512
        $region64: #{tpu_custom_call.1} parent=59 // pred_fallthru
          _
      $region60: #{tpu_custom_call.1} parent=5 // pred_fallthru
        _
    $region6: #{tpu_custom_call.1} parent=1 // loop_footer
      %s21 = sadd.s32 1, %s17
    $region7: #{tpu_custom_call.1} parent=1 // loop_footer_branch
      %16 = sbr.rel target = $region3
    $region8: #{tpu_custom_call.1} parent=1 // loop_exit
      _
    %992 = vsyncpa [#allocation4], 1
    %s993 = scalar_lea.sflag [#allocation4], 1
    %994 = vsyncpa %s993, 1

</llo_original>
